<compile_context>
chip_gen: v5e
topology: v5e:2x2
jax: 0.10.0
libtpu: 0.0.40
codegen_flags: <defaults>
</compile_context>

<pallas_src>
import functools

import jax
import jax.numpy as jnp
from jax.experimental import pallas as pl
from jax.experimental.pallas import tpu as pltpu


def td_conv1d_kernel(x_ref, w1_ref, b1_ref, w2_ref, b2_ref, w3_ref, b3_ref,
                     o_ref, *, act_dtype):
    # x_ref: (C_in, tile_T) f32 straight from HBM; cast to the MXU dtype here
    # (saves the wrapper-side cast pass over x, i.e. a full HBM round trip).
    x = x_ref[...].astype(w1_ref.dtype)

    # conv1d (1x1) + ReLU   (dropout = identity at inference)
    h1 = jnp.dot(w1_ref[...], x, preferred_element_type=jnp.float32)
    h1 = jnp.maximum((h1 + b1_ref[...]).astype(act_dtype), 0)
    h1 = h1.astype(w2_ref.dtype)

    # tdd1 (1x1 conv) + tanh
    h2 = jnp.dot(w2_ref[...], h1, preferred_element_type=jnp.float32)
    h2 = jnp.tanh((h2 + b2_ref[...]).astype(act_dtype)).astype(w3_ref.dtype)

    # tdd2 (1x1 conv) + tanh
    h3 = jnp.dot(w3_ref[...], h2, preferred_element_type=jnp.float32)
    o_ref[...] = jnp.tanh((h3 + b3_ref[...]).astype(act_dtype)).astype(o_ref.dtype)


def _round_up(x, m):
    return ((x + m - 1) // m) * m


def _pick_activation_dtype():
    """bf16 activation math on v6e/v7x (bf16 VPU/EUP); f32 on older chips."""
    try:
        kind = jax.devices()[0].device_kind.lower()
        for old in ("v2", "v3", "v4", "v5"):
            if old in kind:
                return jnp.float32
    except Exception:
        pass
    return jnp.bfloat16


def td_model_conv1d_forward(x_nct, params, *, max_tile_t=2048,
                            compute_dtype=jnp.bfloat16,
                            act_dtype=None,
                            out_dtype=jnp.float32):
    """x_nct: (B, C_in, T) float32, same NCT layout as the PyTorch module."""
    w1, b1, w2, b2, w3, b3 = params
    B, C_in, T = x_nct.shape
    c1 = w1.shape[0]           # 32
    td1 = w2.shape[0]          # 128
    td2 = w3.shape[0]          # 32

    if act_dtype is None:
        act_dtype = _pick_activation_dtype()

    # --- tile selection: largest lane-dense tile, pad T up to a multiple ----
    LANE = 128
    t_lane = _round_up(T, LANE)
    tile_t = max(LANE, (min(max_tile_t, t_lane) // LANE) * LANE)
    # Keep >= 2 grid steps when B == 1 so both v7x TensorCores get work.
    if B == 1 and t_lane >= 2 * LANE:
        tile_t = min(tile_t, max(LANE, (t_lane // 2 // LANE) * LANE))
    t_pad = _round_up(T, tile_t)

    # Pad (f32, only when needed) — no wrapper-side dtype cast of x.
    x_p = x_nct if t_pad == T else jnp.pad(
        x_nct, ((0, 0), (0, 0), (0, t_pad - T)))

    # Small weights -> bf16 MXU operands; biases stay f32 as (C_out, 1).
    w1c = w1.astype(compute_dtype)
    w2c = w2.astype(compute_dtype)
    w3c = w3.astype(compute_dtype)
    b1c = b1.reshape(c1, 1).astype(jnp.float32)
    b2c = b2.reshape(td1, 1).astype(jnp.float32)
    b3c = b3.reshape(td2, 1).astype(jnp.float32)

    grid = (B, t_pad // tile_t)

    flops = 2 * (C_in * c1 + c1 * td1 + td1 * td2) * B * t_pad
    transcendentals = (td1 + td2) * B * t_pad
    bytes_accessed = (B * C_in * t_pad * x_p.dtype.itemsize
                      + B * td2 * t_pad * jnp.dtype(out_dtype).itemsize
                      + (w1c.size + w2c.size + w3c.size) * w1c.dtype.itemsize
                      + (b1c.size + b2c.size + b3c.size) * 4)

    out = pl.pallas_call(
        functools.partial(td_conv1d_kernel, act_dtype=act_dtype),
        out_shape=jax.ShapeDtypeStruct((B, td2, t_pad), out_dtype),
        grid_spec=pltpu.PrefetchScalarGridSpec(
            num_scalar_prefetch=0,
            grid=grid,
            in_specs=[
                # x: batch squeezed, channels on sublanes, time on lanes.
                pl.BlockSpec((None, C_in, tile_t), lambda b, t: (b, 0, t)),
                # Weights / biases: full-array blocks with constant index ->
                # DMA'd once and kept resident across the grid.
                pl.BlockSpec((c1, C_in), lambda b, t: (0, 0)),
                pl.BlockSpec((c1, 1), lambda b, t: (0, 0)),
                pl.BlockSpec((td1, c1), lambda b, t: (0, 0)),
                pl.BlockSpec((td1, 1), lambda b, t: (0, 0)),
                pl.BlockSpec((td2, td1), lambda b, t: (0, 0)),
                pl.BlockSpec((td2, 1), lambda b, t: (0, 0)),
            ],
            out_specs=pl.BlockSpec((None, td2, tile_t), lambda b, t: (b, 0, t)),
        ),
        compiler_params=pltpu.CompilerParams(
            dimension_semantics=("parallel", "parallel")),
        cost_estimate=pl.CostEstimate(
            flops=flops,
            transcendentals=transcendentals,
            bytes_accessed=bytes_accessed),
    )(x_p, w1c, b1c, w2c, b2c, w3c, b3c)

    return out if t_pad == T else out[:, :, :T]


def init_params(key, num_eeg_channels=64, c1_spatial_kernelSize=32,
                td1_size=128, td2_size=32):
    """Deterministic synthetic weights in PyTorch conv1d orientation:
    W: (C_out, C_in)  (kernel_size=1 squeezed),  b: (C_out,)."""
    ks = jax.random.split(key, 6)

    def u(k, shape, fan_in):
        bound = 1.0 / jnp.sqrt(fan_in)
        return jax.random.uniform(k, shape, jnp.float32, -bound, bound)

    w1 = u(ks[0], (c1_spatial_kernelSize, num_eeg_channels), num_eeg_channels)
    b1 = u(ks[1], (c1_spatial_kernelSize,), num_eeg_channels)
    w2 = u(ks[2], (td1_size, c1_spatial_kernelSize), c1_spatial_kernelSize)
    b2 = u(ks[3], (td1_size,), c1_spatial_kernelSize)
    w3 = u(ks[4], (td2_size, td1_size), td1_size)
    b3 = u(ks[5], (td2_size,), td1_size)
    return (w1, b1, w2, b2, w3, b3)


def reference_forward(x_nct, params):
    """Pure-JAX f32 reference of the fused 1x1-conv stack (dropout = identity)."""
    w1, b1, w2, b2, w3, b3 = params
    h1 = jax.nn.relu(jnp.einsum('oc,bct->bot', w1, x_nct) + b1[None, :, None])
    h2 = jnp.tanh(jnp.einsum('oc,bct->bot', w2, h1) + b2[None, :, None])
    h3 = jnp.tanh(jnp.einsum('oc,bct->bot', w3, h2) + b3[None, :, None])
    return h3


if __name__ == "__main__":
    key = jax.random.PRNGKey(0)
    k_x, k_p = jax.random.split(key)

    # Small NCT input consistent with the module (64 EEG channels).
    B, C_in, T = 2, 64, 256
    x = jax.random.normal(k_x, (B, C_in, T), jnp.float32)
    params = init_params(k_p)

    y = td_model_conv1d_forward(x, params)
    y = jax.block_until_ready(y)

    y_ref = reference_forward(x, params)
    assert y.shape == (B, 32, T), y.shape
    # bf16 MXU operands (+ bf16 activation math on v6e/v7x) vs f32 reference:
    # f32 accumulation and tanh-bounded outputs keep the abs error well below
    # 3e-2 (bf16 quantization near |y|~1 is ~4e-3 per layer).
    max_err = float(jnp.max(jnp.abs(y.astype(jnp.float32) - y_ref)))
    assert max_err < 3e-2, f"max abs err {max_err}"

    print("KERNEL_OK")
</pallas_src>

<mosaic_0001>
module attributes {stable_mosaic.version = 11 : i64} {
  func.func @td_conv1d_kernel(%arg0: i32, %arg1: i32, %arg2: memref<1x64x256xf32, #tpu.memory_space<vmem>>, %arg3: memref<32x64xbf16, #tpu.memory_space<vmem>>, %arg4: memref<32x1xf32, #tpu.memory_space<vmem>>, %arg5: memref<128x32xbf16, #tpu.memory_space<vmem>>, %arg6: memref<128x1xf32, #tpu.memory_space<vmem>>, %arg7: memref<32x128xbf16, #tpu.memory_space<vmem>>, %arg8: memref<32x1xf32, #tpu.memory_space<vmem>>, %arg9: memref<1x32x256xf32, #tpu.memory_space<vmem>>) attributes {dimension_semantics = [#tpu.dimension_semantics<parallel>, #tpu.dimension_semantics<parallel>], iteration_bounds = array<i64: 2, 1>, scalar_prefetch = 0 : i64, scratch_operands = 0 : i64, tpu.core_type = #tpu.core_type<tc>, window_params = [{transform_indices = @transform_0, window_bounds = array<i64: 1, 64, 256>}, {pipeline_mode = #tpu.pipeline_mode<synchronous>, transform_indices = @transform_1, window_bounds = array<i64: 32, 64>}, {pipeline_mode = #tpu.pipeline_mode<synchronous>, transform_indices = @transform_2, window_bounds = array<i64: 32, 1>}, {pipeline_mode = #tpu.pipeline_mode<synchronous>, transform_indices = @transform_3, window_bounds = array<i64: 128, 32>}, {pipeline_mode = #tpu.pipeline_mode<synchronous>, transform_indices = @transform_4, window_bounds = array<i64: 128, 1>}, {pipeline_mode = #tpu.pipeline_mode<synchronous>, transform_indices = @transform_5, window_bounds = array<i64: 32, 128>}, {pipeline_mode = #tpu.pipeline_mode<synchronous>, transform_indices = @transform_6, window_bounds = array<i64: 32, 1>}, {transform_indices = @transform_7, window_bounds = array<i64: 1, 32, 256>}]} {
    %c0 = arith.constant 0 : index
    %c0_0 = arith.constant 0 : index
    %c0_1 = arith.constant 0 : index
    %0 = vector.load %arg2[%c0, %c0_0, %c0_1] : memref<1x64x256xf32, #tpu.memory_space<vmem>>, vector<1x64x256xf32>
    %1 = vector.shape_cast %0 : vector<1x64x256xf32> to vector<64x256xf32>
    %2 = arith.truncf %1 : vector<64x256xf32> to vector<64x256xbf16>
    %c0_2 = arith.constant 0 : index
    %c0_3 = arith.constant 0 : index
    %3 = vector.load %arg3[%c0_2, %c0_3] : memref<32x64xbf16, #tpu.memory_space<vmem>>, vector<32x64xbf16>
    %cst = arith.constant dense<0.000000e+00> : vector<32x256xf32>
    %4 = tpu.matmul %3, %2, %cst {dimension_numbers = #tpu.dot_dimension_numbers<[1], [0], [0], [1], [0, 0, 1, 1], [], []>} : vector<32x64xbf16>, vector<64x256xbf16>, vector<32x256xf32> -> vector<32x256xf32>
    %c0_4 = arith.constant 0 : index
    %c0_5 = arith.constant 0 : index
    %5 = vector.load %arg4[%c0_4, %c0_5] : memref<32x1xf32, #tpu.memory_space<vmem>>, vector<32x1xf32>
    %6 = vector.broadcast %5 : vector<32x1xf32> to vector<32x256xf32>
    %7 = arith.addf %4, %6 : vector<32x256xf32>
    %8 = arith.truncf %7 : vector<32x256xf32> to vector<32x256xbf16>
    %cst_6 = arith.constant 0.000000e+00 : bf16
    %9 = vector.broadcast %cst_6 : bf16 to vector<32x256xbf16>
    %10 = arith.maximumf %8, %9 : vector<32x256xbf16>
    %c0_7 = arith.constant 0 : index
    %c0_8 = arith.constant 0 : index
    %11 = vector.load %arg5[%c0_7, %c0_8] : memref<128x32xbf16, #tpu.memory_space<vmem>>, vector<128x32xbf16>
    %cst_9 = arith.constant dense<0.000000e+00> : vector<128x256xf32>
    %12 = tpu.matmul %11, %10, %cst_9 {dimension_numbers = #tpu.dot_dimension_numbers<[1], [0], [0], [1], [0, 0, 1, 1], [], []>} : vector<128x32xbf16>, vector<32x256xbf16>, vector<128x256xf32> -> vector<128x256xf32>
    %c0_10 = arith.constant 0 : index
    %c0_11 = arith.constant 0 : index
    %13 = vector.load %arg6[%c0_10, %c0_11] : memref<128x1xf32, #tpu.memory_space<vmem>>, vector<128x1xf32>
    %14 = vector.broadcast %13 : vector<128x1xf32> to vector<128x256xf32>
    %15 = arith.addf %12, %14 : vector<128x256xf32>
    %16 = arith.truncf %15 : vector<128x256xf32> to vector<128x256xbf16>
    %17 = math.tanh %16 : vector<128x256xbf16>
    %c0_12 = arith.constant 0 : index
    %c0_13 = arith.constant 0 : index
    %18 = vector.load %arg7[%c0_12, %c0_13] : memref<32x128xbf16, #tpu.memory_space<vmem>>, vector<32x128xbf16>
    %cst_14 = arith.constant dense<0.000000e+00> : vector<32x256xf32>
    %19 = tpu.matmul %18, %17, %cst_14 {dimension_numbers = #tpu.dot_dimension_numbers<[1], [0], [0], [1], [0, 0, 1, 1], [], []>} : vector<32x128xbf16>, vector<128x256xbf16>, vector<32x256xf32> -> vector<32x256xf32>
    %c0_15 = arith.constant 0 : index
    %c0_16 = arith.constant 0 : index
    %20 = vector.load %arg8[%c0_15, %c0_16] : memref<32x1xf32, #tpu.memory_space<vmem>>, vector<32x1xf32>
    %21 = vector.broadcast %20 : vector<32x1xf32> to vector<32x256xf32>
    %22 = arith.addf %19, %21 : vector<32x256xf32>
    %23 = arith.truncf %22 : vector<32x256xf32> to vector<32x256xbf16>
    %24 = math.tanh %23 : vector<32x256xbf16>
    %25 = arith.extf %24 : vector<32x256xbf16> to vector<32x256xf32>
    %c0_17 = arith.constant 0 : index
    %c0_18 = arith.constant 0 : index
    %c0_19 = arith.constant 0 : index
    %26 = vector.load %arg9[%c0_17, %c0_18, %c0_19] : memref<1x32x256xf32, #tpu.memory_space<vmem>>, vector<1x32x256xf32>
    %27 = vector.shape_cast %26 : vector<1x32x256xf32> to vector<32x256xf32>
    %28 = vector.shape_cast %25 : vector<32x256xf32> to vector<1x32x256xf32>
    tpu.vector_store %arg9[%c0_17, %c0_18, %c0_19], %28 {strides = array<i32>} : memref<1x32x256xf32, #tpu.memory_space<vmem>>, vector<1x32x256xf32>,
    return
  }
  func.func @transform_0(%arg0: i32, %arg1: i32) -> (i32, i32, i32) {
    %c0_i32 = arith.constant 0 : i32
    %c0_i32_0 = arith.constant 0 : i32
    return %arg0, %c0_i32, %arg1 : i32, i32, i32
  }
  func.func @transform_1(%arg0: i32, %arg1: i32) -> (i32, i32) {
    %c0_i32 = arith.constant 0 : i32
    %c0_i32_0 = arith.constant 0 : i32
    %c0_i32_1 = arith.constant 0 : i32
    return %c0_i32, %c0_i32_0 : i32, i32
  }
  func.func @transform_2(%arg0: i32, %arg1: i32) -> (i32, i32) {
    %c0_i32 = arith.constant 0 : i32
    %c0_i32_0 = arith.constant 0 : i32
    %c0_i32_1 = arith.constant 0 : i32
    return %c0_i32, %c0_i32_0 : i32, i32
  }
  func.func @transform_3(%arg0: i32, %arg1: i32) -> (i32, i32) {
    %c0_i32 = arith.constant 0 : i32
    %c0_i32_0 = arith.constant 0 : i32
    %c0_i32_1 = arith.constant 0 : i32
    return %c0_i32, %c0_i32_0 : i32, i32
  }
  func.func @transform_4(%arg0: i32, %arg1: i32) -> (i32, i32) {
    %c0_i32 = arith.constant 0 : i32
    %c0_i32_0 = arith.constant 0 : i32
    %c0_i32_1 = arith.constant 0 : i32
    return %c0_i32, %c0_i32_0 : i32, i32
  }
  func.func @transform_5(%arg0: i32, %arg1: i32) -> (i32, i32) {
    %c0_i32 = arith.constant 0 : i32
    %c0_i32_0 = arith.constant 0 : i32
    %c0_i32_1 = arith.constant 0 : i32
    return %c0_i32, %c0_i32_0 : i32, i32
  }
  func.func @transform_6(%arg0: i32, %arg1: i32) -> (i32, i32) {
    %c0_i32 = arith.constant 0 : i32
    %c0_i32_0 = arith.constant 0 : i32
    %c0_i32_1 = arith.constant 0 : i32
    return %c0_i32, %c0_i32_0 : i32, i32
  }
  func.func @transform_7(%arg0: i32, %arg1: i32) -> (i32, i32, i32) {
    %c0_i32 = arith.constant 0 : i32
    %c0_i32_0 = arith.constant 0 : i32
    return %arg0, %c0_i32, %arg1 : i32, i32, i32
  }
}

</mosaic_0001>

<llo_original>
// kernel: tpu_custom_call.1
$region0: #{tpu_custom_call.1}
  #allocation0 [shape = 'u32[]', space=smem, size = 0x4, offset = 0x4, fixed_abs, tag = 'smem constant byte address 0x4 - core index']
  #allocation1 [shape = 'u32[72,128]{1,0:T(1,128)}', space=vmem, size = 0x9000, scoped, tag = 'internal scratch']
  %s0 = inlined_call_operand.vmem [shape: f32[2,64,256], index: 0, kind: input, shape index: {}]
  %s1 = inlined_call_operand.vmem [shape: bf16[32,64], index: 1, kind: input, shape index: {}]
  %s2 = inlined_call_operand.vmem [shape: f32[32,1], index: 2, kind: input, shape index: {}]
  %s3 = inlined_call_operand.vmem [shape: bf16[128,32], index: 3, kind: input, shape index: {}]
  %s4 = inlined_call_operand.vmem [shape: f32[128,1], index: 4, kind: input, shape index: {}]
  %s5 = inlined_call_operand.hbm [shape: bf16[32,128], index: 5, kind: input, shape index: {}]
  %s6 = inlined_call_operand.vmem [shape: f32[32,1], index: 6, kind: input, shape index: {}]
  %s7 = inlined_call_operand.hbm [shape: f32[2,32,256], index: 7, kind: output, shape index: {}]
  %s8 = sld [smem:[#allocation0]]
  $region65: #{tpu_custom_call.1} parent=0
    _
  %s10 = ssub.s32 1, %s8
  %s11 = scalar_select 0, %s10, %s8
  $region1: #{tpu_custom_call.1} parent=0
    #allocation2 [shape = 'u8[8192]{0}', space=vmem, size = 0x2000, scoped, tag = 'input window, operand 5, single buffered']
    #allocation3 [shape = 's32[2]{0}', space=sflag, size = 0x8, scoped, tag = 'scoped memory for tpu_custom_call.1']
    #allocation4 [shape = 's32[2]{0}', space=sflag, size = 0x8, scoped, tag = 'scoped memory for tpu_custom_call.1']
    #allocation5 [shape = 'u8[65536]{0}', space=vmem, size = 0x10000, scoped, tag = 'output window, operand 0']
    %12 = vsyncpa [#allocation3], 0
    %13 = vsyncpa [#allocation4], 0
    %s14 = scalar_lea.sflag [#allocation4], 1
    %15 = vsyncpa %s14, 0
    loop: start=0, step=1, limit=4
    $region2: #{tpu_custom_call.1} parent=1 // loop_pre_header
      _
    $region3: #{tpu_custom_call.1} parent=1 // loop_header
      %s17 = sphi 0, %s21
      %p18 = scmp.ge.s32.totalorder %s17, 4
      %s24 = sphi 0, %s36
      %s25 = sphi 0, %s32
      %s26 = sphi 0, %s24
      %s27 = sphi 0, %s25
      %s28 = sphi 0, %s26
      %s29 = sphi 0, %s27
      %s41 = sphi 0, %s43
      %s44 = sphi 0, %s41
      %s45 = sphi 0, %s44
      %s61 = sphi 0, %s45
      %s65 = sphi 0, %s65
      %s67 = sphi 0, %s65
      %s68 = sphi 0, %s67
      %s82 = sphi 0, %s68
      %s86 = sphi 0, %s86
      %s88 = sphi 0, %s86
      %s89 = sphi 0, %s88
      %s103 = sphi 0, %s89
      %s107 = sphi 0, %s107
      %s109 = sphi 0, %s107
      %s110 = sphi 0, %s109
      %s124 = sphi 0, %s110
      %s128 = sphi 0, %s128
      %s130 = sphi 0, %s128
      %s131 = sphi 0, %s130
      %s145 = sphi 0, %s131
      %s149 = sphi 0, %s149
      %s151 = sphi 0, %s149
      %s152 = sphi 0, %s151
      %s166 = sphi 0, %s152
      %s170 = sphi 0, %s170
      %s172 = sphi 0, %s170
      %s173 = sphi 0, %s172
      %s187 = sphi 0, %s173
      %s195 = sphi 0, %s197
      %s198 = sphi 0, %s195
      %s199 = sphi 0, %s198
      %s215 = sphi 0, %s199
    $region4: #{tpu_custom_call.1} parent=1 // loop_header_branch
      %20 = sbr.rel (%p18) target = $region8
    $region5: #{tpu_custom_call.1} parent=1 // loop_body
      %s22 = ssub.s32 %s17, 1
      %s23 = ssub.s32 %s17, 2
      %s30 = sadd.s32 1, %s25
      %p31 = scmp.ge.s32.totalorder %s30, 1
      %s32 = scalar_select %p31, 0, %s30
      %s33 = sadd.s32 1, %s24
      %s34 = scalar_select %p31, %s33, %s24
      %p35 = scmp.ge.s32.totalorder %s34, 2
      %s36 = scalar_select %p35, 0, %s34
      %s37 = ssub.s32 %s24, %s36
      %s38 = ssub.s32 %s25, %s32
      %s39 = sor.u32 %s37, %s38
      %p40 = scmp.eq.s32.totalorder %s39, 0
      %s42 = sadd.s32 %s41, 1
      %s43 = scalar_select %p40, %s41, %s42
      %p46 = pneg %p40
      %p47 = scmp.eq.s32.totalorder %s17, 1
      %p48 = por %p46, %p47
      %p49 = scmp.ne.s32.totalorder %s41, %s44
      %p50 = scmp.eq.s32.totalorder %s17, 0
      %p51 = por %p49, %p50
      %p52 = scmp.ne.s32.totalorder %s41, %s44
      %p53 = scmp.eq.s32.totalorder %s22, 1
      %p54 = por %p52, %p53
      %p55 = scmp.ne.s32.totalorder %s44, %s45
      %p56 = scmp.eq.s32.totalorder %s22, 0
      %p57 = por %p55, %p56
      %p58 = scmp.ne.s32.totalorder %s44, %s45
      %p59 = scmp.eq.s32.totalorder %s23, 1
      %p60 = por %p58, %p59
      %p62 = scmp.ne.s32.totalorder %s45, %s61
      %p63 = scmp.eq.s32.totalorder %s23, 0
      %p64 = por %p62, %p63
      %s66 = sadd.s32 %s65, 1
      %p69 = scmp.eq.s32.totalorder %s17, 1
      %p70 = scmp.ne.s32.totalorder %s65, %s67
      %p71 = scmp.eq.s32.totalorder %s17, 0
      %p72 = por %p70, %p71
      %p73 = scmp.ne.s32.totalorder %s65, %s67
      %p74 = scmp.eq.s32.totalorder %s22, 1
      %p75 = por %p73, %p74
      %p76 = scmp.ne.s32.totalorder %s67, %s68
      %p77 = scmp.eq.s32.totalorder %s22, 0
      %p78 = por %p76, %p77
      %p79 = scmp.ne.s32.totalorder %s67, %s68
      %p80 = scmp.eq.s32.totalorder %s23, 1
      %p81 = por %p79, %p80
      %p83 = scmp.ne.s32.totalorder %s68, %s82
      %p84 = scmp.eq.s32.totalorder %s23, 0
      %p85 = por %p83, %p84
      %s87 = sadd.s32 %s86, 1
      %p90 = scmp.eq.s32.totalorder %s17, 1
      %p91 = scmp.ne.s32.totalorder %s86, %s88
      %p92 = scmp.eq.s32.totalorder %s17, 0
      %p93 = por %p91, %p92
      %p94 = scmp.ne.s32.totalorder %s86, %s88
      %p95 = scmp.eq.s32.totalorder %s22, 1
      %p96 = por %p94, %p95
      %p97 = scmp.ne.s32.totalorder %s88, %s89
      %p98 = scmp.eq.s32.totalorder %s22, 0
      %p99 = por %p97, %p98
      %p100 = scmp.ne.s32.totalorder %s88, %s89
      %p101 = scmp.eq.s32.totalorder %s23, 1
      %p102 = por %p100, %p101
      %p104 = scmp.ne.s32.totalorder %s89, %s103
      %p105 = scmp.eq.s32.totalorder %s23, 0
      %p106 = por %p104, %p105
      %s108 = sadd.s32 %s107, 1
      %p111 = scmp.eq.s32.totalorder %s17, 1
      %p112 = scmp.ne.s32.totalorder %s107, %s109
      %p113 = scmp.eq.s32.totalorder %s17, 0
      %p114 = por %p112, %p113
      %p115 = scmp.ne.s32.totalorder %s107, %s109
      %p116 = scmp.eq.s32.totalorder %s22, 1
      %p117 = por %p115, %p116
      %p118 = scmp.ne.s32.totalorder %s109, %s110
      %p119 = scmp.eq.s32.totalorder %s22, 0
      %p120 = por %p118, %p119
      %p121 = scmp.ne.s32.totalorder %s109, %s110
      %p122 = scmp.eq.s32.totalorder %s23, 1
      %p123 = por %p121, %p122
      %p125 = scmp.ne.s32.totalorder %s110, %s124
      %p126 = scmp.eq.s32.totalorder %s23, 0
      %p127 = por %p125, %p126
      %s129 = sadd.s32 %s128, 1
      %p132 = scmp.eq.s32.totalorder %s17, 1
      %p133 = scmp.ne.s32.totalorder %s128, %s130
      %p134 = scmp.eq.s32.totalorder %s17, 0
      %p135 = por %p133, %p134
      %p136 = scmp.ne.s32.totalorder %s128, %s130
      %p137 = scmp.eq.s32.totalorder %s22, 1
      %p138 = por %p136, %p137
      %p139 = scmp.ne.s32.totalorder %s130, %s131
      %p140 = scmp.eq.s32.totalorder %s22, 0
      %p141 = por %p139, %p140
      %p142 = scmp.ne.s32.totalorder %s130, %s131
      %p143 = scmp.eq.s32.totalorder %s23, 1
      %p144 = por %p142, %p143
      %p146 = scmp.ne.s32.totalorder %s131, %s145
      %p147 = scmp.eq.s32.totalorder %s23, 0
      %p148 = por %p146, %p147
      %s150 = sadd.s32 %s149, 1
      %p153 = scmp.eq.s32.totalorder %s17, 1
      %p154 = scmp.ne.s32.totalorder %s149, %s151
      %p155 = scmp.eq.s32.totalorder %s17, 0
      %p156 = por %p154, %p155
      %p157 = scmp.ne.s32.totalorder %s149, %s151
      %p158 = scmp.eq.s32.totalorder %s22, 1
      %p159 = por %p157, %p158
      %p160 = scmp.ne.s32.totalorder %s151, %s152
      %p161 = scmp.eq.s32.totalorder %s22, 0
      %p162 = por %p160, %p161
      %p163 = scmp.ne.s32.totalorder %s151, %s152
      %p164 = scmp.eq.s32.totalorder %s23, 1
      %p165 = por %p163, %p164
      %p167 = scmp.ne.s32.totalorder %s152, %s166
      %p168 = scmp.eq.s32.totalorder %s23, 0
      %p169 = por %p167, %p168
      %s171 = sadd.s32 %s170, 1
      %p174 = scmp.eq.s32.totalorder %s17, 1
      %p175 = scmp.ne.s32.totalorder %s170, %s172
      %p176 = scmp.eq.s32.totalorder %s17, 0
      %p177 = por %p175, %p176
      %p178 = scmp.ne.s32.totalorder %s170, %s172
      %p179 = scmp.eq.s32.totalorder %s22, 1
      %p180 = por %p178, %p179
      %p181 = scmp.ne.s32.totalorder %s172, %s173
      %p182 = scmp.eq.s32.totalorder %s22, 0
      %p183 = por %p181, %p182
      %p184 = scmp.ne.s32.totalorder %s172, %s173
      %p185 = scmp.eq.s32.totalorder %s23, 1
      %p186 = por %p184, %p185
      %p188 = scmp.ne.s32.totalorder %s173, %s187
      %p189 = scmp.eq.s32.totalorder %s23, 0
      %p190 = por %p188, %p189
      %s191 = ssub.s32 %s24, %s36
      %s192 = ssub.s32 %s25, %s32
      %s193 = sor.u32 %s191, %s192
      %p194 = scmp.eq.s32.totalorder %s193, 0
      %s196 = sadd.s32 %s195, 1
      %s197 = scalar_select %p194, %s195, %s196
      %p200 = pneg %p194
      %p201 = scmp.eq.s32.totalorder %s17, 1
      %p202 = por %p200, %p201
      %p203 = scmp.ne.s32.totalorder %s195, %s198
      %p204 = scmp.eq.s32.totalorder %s17, 0
      %p205 = por %p203, %p204
      %p206 = scmp.ne.s32.totalorder %s195, %s198
      %p207 = scmp.eq.s32.totalorder %s22, 1
      %p208 = por %p206, %p207
      %p209 = scmp.ne.s32.totalorder %s198, %s199
      %p210 = scmp.eq.s32.totalorder %s22, 0
      %p211 = por %p209, %p210
      %p212 = scmp.ne.s32.totalorder %s198, %s199
      %p213 = scmp.eq.s32.totalorder %s23, 1
      %p214 = por %p212, %p213
      %p216 = scmp.ne.s32.totalorder %s199, %s215
      %p217 = scmp.eq.s32.totalorder %s23, 0
      %p218 = por %p216, %p217
      %p219 = scmp.le.s32.totalorder 1, %s17
      %p220 = scmp.lt.s32.totalorder %s17, 3
      %p221 = pnand %p219, %p220
      %p222 = pneg %p221
      // Predicated region
      $region9: #{tpu_custom_call.1} parent=5 // pred_check
        _
      $region10: #{tpu_custom_call.1} parent=5 // pred_check_branch
        %224 = sbr.rel (%p221) target = $region12
      $region11: #{tpu_custom_call.1} parent=5 // pred_region
        %s225 = ssub.s32 %s17, 1
        // Predicated region
        $region13: #{tpu_custom_call.1} parent=11 // pred_check
          %p226 = pneg %p78
        $region14: #{tpu_custom_call.1} parent=11 // pred_check_branch
          %228 = sbr.rel (%p226) target = $region16
        $region15: #{tpu_custom_call.1} parent=11 // pred_region
          _
        $region16: #{tpu_custom_call.1} parent=11 // pred_fallthru
          _
        // Predicated region
        $region17: #{tpu_custom_call.1} parent=11 // pred_check
          %p229 = pneg %p99
        $region18: #{tpu_custom_call.1} parent=11 // pred_check_branch
          %231 = sbr.rel (%p229) target = $region20
        $region19: #{tpu_custom_call.1} parent=11 // pred_region
          _
        $region20: #{tpu_custom_call.1} parent=11 // pred_fallthru
          _
        // Predicated region
        $region21: #{tpu_custom_call.1} parent=11 // pred_check
          %p232 = pneg %p120
        $region22: #{tpu_custom_call.1} parent=11 // pred_check_branch
          %234 = sbr.rel (%p232) target = $region24
        $region23: #{tpu_custom_call.1} parent=11 // pred_region
          _
        $region24: #{tpu_custom_call.1} parent=11 // pred_fallthru
          _
        // Predicated region
        $region25: #{tpu_custom_call.1} parent=11 // pred_check
          %p235 = pneg %p141
        $region26: #{tpu_custom_call.1} parent=11 // pred_check_branch
          %237 = sbr.rel (%p235) target = $region28
        $region27: #{tpu_custom_call.1} parent=11 // pred_region
          _
        $region28: #{tpu_custom_call.1} parent=11 // pred_fallthru
          _
        // Predicated region
        $region29: #{tpu_custom_call.1} parent=11 // pred_check
          %p238 = pneg %p162
        $region30: #{tpu_custom_call.1} parent=11 // pred_check_branch
          %240 = sbr.rel (%p238) target = $region32
        $region31: #{tpu_custom_call.1} parent=11 // pred_region
          %242 = vsyncadd [#allocation3], 0
          %s243 = sshll.u32 %s5, 4
          %s244 = int_to_ptr.hbm [resolvable:$true] %s243
          %s245 = sshll.u32 [#allocation2], 4
          %s246 = int_to_ptr.vmem [resolvable:$true] %s245
          %251 = dma.hbm_to_vmem [thread:$0]  %s244, 256, %s246, [#allocation3], 64, 64, 4
        $region32: #{tpu_custom_call.1} parent=11 // pred_fallthru
          _
        // Predicated region
        $region33: #{tpu_custom_call.1} parent=11 // pred_check
          %p252 = pneg %p183
        $region34: #{tpu_custom_call.1} parent=11 // pred_check_branch
          %254 = sbr.rel (%p252) target = $region36
        $region35: #{tpu_custom_call.1} parent=11 // pred_region
          _
        $region36: #{tpu_custom_call.1} parent=11 // pred_fallthru
          _
      $region12: #{tpu_custom_call.1} parent=5 // pred_fallthru
        _
      %p255 = scmp.lt.s32.totalorder %s17, 2
      // Predicated region
      $region37: #{tpu_custom_call.1} parent=5 // pred_check
        %p256 = pneg %p255
      $region38: #{tpu_custom_call.1} parent=5 // pred_check_branch
        %258 = sbr.rel (%p256) target = $region40
      $region39: #{tpu_custom_call.1} parent=5 // pred_region
        // Predicated region
        $region41: #{tpu_custom_call.1} parent=39 // pred_check
          %p259 = pneg %p51
        $region42: #{tpu_custom_call.1} parent=39 // pred_check_branch
          %261 = sbr.rel (%p259) target = $region44
        $region43: #{tpu_custom_call.1} parent=39 // pred_region
          %s262 = smul.u32 2, %s25
          %p263 = scmp.lt.s32.totalorder %s24, 1
          %s264 = scalar_select %p263, %s24, 1
          %p265 = scmp.lt.s32.totalorder %s262, 1
          %s266 = scalar_select %p265, %s262, 1
          %s267 = smul.addr %s264, 16
          %s268 = sadd.s32 %s266, %s267
          %s269 = smul.addr %s268, 8
          %s270 = scalar_lea.vmem %s0, %s269
          %s271 = smul.u32 2, %s25
        $region44: #{tpu_custom_call.1} parent=39 // pred_fallthru
          _
      $region40: #{tpu_custom_call.1} parent=5 // pred_fallthru
        _
      %p272 = scmp.le.s32.totalorder 1, %s17
      %p273 = scmp.lt.s32.totalorder %s17, 3
      %p274 = pnand %p272, %p273
      %p275 = pneg %p274
      // Predicated region
      $region45: #{tpu_custom_call.1} parent=5 // pred_check
        _
      $region46: #{tpu_custom_call.1} parent=5 // pred_check_branch
        %277 = sbr.rel (%p274) target = $region48
      $region47: #{tpu_custom_call.1} parent=5 // pred_region
        %s278 = ssub.s32 %s17, 1
        // Predicated region
        $region49: #{tpu_custom_call.1} parent=47 // pred_check
          %p279 = pneg %p162
        $region50: #{tpu_custom_call.1} parent=47 // pred_check_branch
          %281 = sbr.rel (%p279) target = $region52
        $region51: #{tpu_custom_call.1} parent=47 // pred_region
          %283 = dma.done [#allocation3], 256
        $region52: #{tpu_custom_call.1} parent=47 // pred_fallthru
          _
        %s284 = smul.u32 2, %s27
        %p285 = scmp.lt.s32.totalorder %s26, 1
        %s286 = scalar_select %p285, %s26, 1
        %p287 = scmp.lt.s32.totalorder %s284, 1
        %s288 = scalar_select %p287, %s284, 1
        %s289 = smul.addr %s286, 16
        %s290 = sadd.s32 %s288, %s289
        %s291 = smul.addr %s290, 8
        %s292 = scalar_lea.vmem %s0, %s291
        %p293 = pneg %p57
        %p294 = pneg %p54
        %p295 = pneg %p78
        %p296 = pneg %p75
        %p297 = pneg %p99
        %p298 = pneg %p96
        %p299 = pneg %p120
        %p300 = pneg %p117
        %p301 = pneg %p141
        %p302 = pneg %p138
        %p303 = pneg %p162
        %p304 = pneg %p159
        %p305 = pneg %p183
        %p306 = pneg %p180
        %p307 = pneg %p211
        %p308 = pneg %p208
        %s309 = sand.u32 %s198, 1
        %s310 = scalar_lea.sflag [#allocation4], %s309
        %s311 = sand.u32 %s198, 1
        %s312 = smul.addr %s311, 64
        %s313 = scalar_lea.vmem [#allocation5], %s312
        %s314 = smul.u32 2, %s27
        %p315 = scmp.lt.s32.totalorder %s26, 1
        %s316 = scalar_select %p315, %s26, 1
        %p317 = scmp.lt.s32.totalorder %s314, 1
        %s318 = scalar_select %p317, %s314, 1
        %s319 = smul.addr %s316, 16
        %s320 = sadd.s32 %s318, %s319
        %s321 = smul.addr %s320, 8
        %s322 = scalar_lea.vmem %s0, %s321
        %s323 = smul.u32 2, %s27
        %s324 = smul.u32 2, %s27
        %v326 = vld [vmem:[%s322] sm:$0xff]
        %v327 = vld [vmem:[%s322 + $0x8] sm:$0xff]
        %v328 = vld [vmem:[%s322 + $0x10] sm:$0xff]
        %v329 = vld [vmem:[%s322 + $0x18] sm:$0xff]
        %v330 = vld [vmem:[%s322 + $0x20] sm:$0xff]
        %v331 = vld [vmem:[%s322 + $0x28] sm:$0xff]
        %v332 = vld [vmem:[%s322 + $0x30] sm:$0xff]
        %v333 = vld [vmem:[%s322 + $0x38] sm:$0xff]
        %v334 = vld [vmem:[%s322 + $0x40] sm:$0xff]
        %v335 = vld [vmem:[%s322 + $0x48] sm:$0xff]
        %v336 = vld [vmem:[%s322 + $0x50] sm:$0xff]
        %v337 = vld [vmem:[%s322 + $0x58] sm:$0xff]
        %v338 = vld [vmem:[%s322 + $0x60] sm:$0xff]
        %v339 = vld [vmem:[%s322 + $0x68] sm:$0xff]
        %v340 = vld [vmem:[%s322 + $0x70] sm:$0xff]
        %v341 = vld [vmem:[%s322 + $0x78] sm:$0xff]
        %v342 = vpack.c.bf16 %v328, %v326
        %v343 = vpack.c.bf16 %v329, %v327
        %v344 = vpack.c.bf16 %v332, %v330
        %v345 = vpack.c.bf16 %v333, %v331
        %v346 = vpack.c.bf16 %v336, %v334
        %v347 = vpack.c.bf16 %v337, %v335
        %v348 = vpack.c.bf16 %v340, %v338
        %v349 = vpack.c.bf16 %v341, %v339
        %v350 = vld [vmem:[%s1] sm:$0xf]
        %v351 = vld [vmem:[%s1 + $0x4] sm:$0xf]
        %v352 = vld [vmem:[%s1 + $0x8] sm:$0xf]
        %v353 = vld [vmem:[%s1 + $0xc] sm:$0xf]
        %v354 = vld [vmem:[%s2] sm:$0xff]
        %v355 = vld [vmem:[%s2 + $0x8] sm:$0xff]
        %v356 = vld [vmem:[%s2 + $0x10] sm:$0xff]
        %v357 = vld [vmem:[%s2 + $0x18] sm:$0xff]
        %359 = vset.pattern.permute.xlu0 0
        %360 = vperm.xlu0 %359, %v354
        %v361 = vpop.permute.xlu0 %360
        %364 = vset.pattern.permute.xlu0 0
        %365 = vperm.xlu0 %364, %v355
        %v366 = vpop.permute.xlu0 %365
        %369 = vset.pattern.permute.xlu0 0
        %370 = vperm.xlu0 %369, %v356
        %v371 = vpop.permute.xlu0 %370
        %374 = vset.pattern.permute.xlu0 0
        %375 = vperm.xlu0 %374, %v357
        %v376 = vpop.permute.xlu0 %375
        %v382 = vunpack.c.l.b16 %v350
        %v383 = vunpack.c.l.b16 %v351
        %v384 = vunpack.c.l.b16 %v352
        %v385 = vunpack.c.l.b16 %v353
        %v386 = vpack.c.b16 %v383, %v382
        %v387 = vpack.c.b16 %v385, %v384
        %vm388 = vcmask 523264
        %v390 = vsel %vm388, %v386, 0
        %v393 = vsel %vm388, %v387, 0
        %395 = vmatpush.bf16.msra.mxu0 0
        %396 = vmatpush.bf16.msra.mxu0 0
        %397 = vmatpush.bf16.msra.mxu0 0
        %398 = vmatpush.bf16.msra.mxu0 0
        %399 = vmatpush.bf16.msra.mxu0 %v348
        %400 = vmatpush.bf16.msra.mxu0 %v346
        %401 = vmatpush.bf16.msra.mxu0 %v344
        %402 = vmatpush.bf16.msra.mxu0 %v342
        %403 = vmatmul.bf16.gmra.mxu0 %v390
        %v404 = vpop.f32.mrf.mxu0
        %v405 = vadd.f32 %v361, %v404
        %v406 = vpop.f32.mrf.mxu0
        %v407 = vadd.f32 %v366, %v406
        %408 = vmatmul.bf16.gmra.mxu0 %v393
        %v409 = vpop.f32.mrf.mxu0
        %v410 = vadd.f32 %v371, %v409
        %v411 = vpop.f32.mrf.mxu0
        %v412 = vadd.f32 %v376, %v411
        %413 = vdwg.mxu0
        %414 = vmatpush.bf16.msra.mxu0 0
        %415 = vmatpush.bf16.msra.mxu0 0
        %416 = vmatpush.bf16.msra.mxu0 0
        %417 = vmatpush.bf16.msra.mxu0 0
        %418 = vmatpush.bf16.msra.mxu0 %v349
        %419 = vmatpush.bf16.msra.mxu0 %v347
        %420 = vmatpush.bf16.msra.mxu0 %v345
        %421 = vmatpush.bf16.msra.mxu0 %v343
        %422 = vmatmul.bf16.gmra.mxu0 %v390
        %v423 = vpop.f32.mrf.mxu0
        %v424 = vadd.f32 %v361, %v423
        %v425 = vpop.f32.mrf.mxu0
        %v426 = vadd.f32 %v366, %v425
        %427 = vmatmul.bf16.gmra.mxu0 %v393
        %v428 = vpop.f32.mrf.mxu0
        %v429 = vadd.f32 %v371, %v428
        %v430 = vpop.f32.mrf.mxu0
        %v431 = vadd.f32 %v376, %v430
        %432 = vdwg.mxu0
        %v433 = vpack.c.bf16 %v424, %v405
        %v434 = vpack.c.bf16 %v426, %v407
        %v435 = vpack.c.bf16 %v429, %v410
        %v436 = vpack.c.bf16 %v431, %v412
        %v437 = vunpack.c.l.bf16 %v433
        %v438 = vunpack.c.h.bf16 %v433
        %v439 = vunpack.c.l.bf16 %v434
        %v440 = vunpack.c.h.bf16 %v434
        %v441 = vunpack.c.l.bf16 %v435
        %v442 = vunpack.c.h.bf16 %v435
        %v443 = vunpack.c.l.bf16 %v436
        %v444 = vunpack.c.h.bf16 %v436
        %v445 = vmax.f32 %v437, 0.0
        %v446 = vmax.f32 %v438, 0.0
        %v447 = vmax.f32 %v439, 0.0
        %v448 = vmax.f32 %v440, 0.0
        %v449 = vmax.f32 %v441, 0.0
        %v450 = vmax.f32 %v442, 0.0
        %v451 = vmax.f32 %v443, 0.0
        %v452 = vmax.f32 %v444, 0.0
        %v453 = vpack.c.bf16 %v447, %v445
        %v454 = vpack.c.bf16 %v448, %v446
        %v455 = vpack.c.bf16 %v451, %v449
        %v456 = vpack.c.bf16 %v452, %v450
        %v457 = vld [vmem:[%s3] sm:$0xf]
        %v458 = vld [vmem:[%s3 + $0x4] sm:$0xf]
        %v459 = vld [vmem:[%s3 + $0x8] sm:$0xf]
        %v460 = vld [vmem:[%s3 + $0xc] sm:$0xf]
        %v461 = vld [vmem:[%s3 + $0x10] sm:$0xf]
        %v462 = vld [vmem:[%s3 + $0x14] sm:$0xf]
        %v463 = vld [vmem:[%s3 + $0x18] sm:$0xf]
        %v464 = vld [vmem:[%s3 + $0x1c] sm:$0xf]
        %v465 = vld [vmem:[%s3 + $0x20] sm:$0xf]
        %v466 = vld [vmem:[%s3 + $0x24] sm:$0xf]
        %v467 = vld [vmem:[%s3 + $0x28] sm:$0xf]
        %v468 = vld [vmem:[%s3 + $0x2c] sm:$0xf]
        %v469 = vld [vmem:[%s3 + $0x30] sm:$0xf]
        %v470 = vld [vmem:[%s3 + $0x34] sm:$0xf]
        %v471 = vld [vmem:[%s3 + $0x38] sm:$0xf]
        %v472 = vld [vmem:[%s3 + $0x3c] sm:$0xf]
        %v473 = vld [vmem:[%s4] sm:$0xff]
        %v474 = vld [vmem:[%s4 + $0x8] sm:$0xff]
        %v475 = vld [vmem:[%s4 + $0x10] sm:$0xff]
        %v476 = vld [vmem:[%s4 + $0x18] sm:$0xff]
        %v477 = vld [vmem:[%s4 + $0x20] sm:$0xff]
        %v478 = vld [vmem:[%s4 + $0x28] sm:$0xff]
        %v479 = vld [vmem:[%s4 + $0x30] sm:$0xff]
        %v480 = vld [vmem:[%s4 + $0x38] sm:$0xff]
        %v481 = vld [vmem:[%s4 + $0x40] sm:$0xff]
        %v482 = vld [vmem:[%s4 + $0x48] sm:$0xff]
        %v483 = vld [vmem:[%s4 + $0x50] sm:$0xff]
        %v484 = vld [vmem:[%s4 + $0x58] sm:$0xff]
        %v485 = vld [vmem:[%s4 + $0x60] sm:$0xff]
        %v486 = vld [vmem:[%s4 + $0x68] sm:$0xff]
        %v487 = vld [vmem:[%s4 + $0x70] sm:$0xff]
        %v488 = vld [vmem:[%s4 + $0x78] sm:$0xff]
        %490 = vset.pattern.permute.xlu0 0
        %491 = vperm.xlu0 %490, %v473
        %v492 = vpop.permute.xlu0 %491
        %495 = vset.pattern.permute.xlu0 0
        %496 = vperm.xlu0 %495, %v474
        %v497 = vpop.permute.xlu0 %496
        %500 = vset.pattern.permute.xlu0 0
        %501 = vperm.xlu0 %500, %v475
        %v502 = vpop.permute.xlu0 %501
        %505 = vset.pattern.permute.xlu0 0
        %506 = vperm.xlu0 %505, %v476
        %v507 = vpop.permute.xlu0 %506
        %510 = vset.pattern.permute.xlu0 0
        %511 = vperm.xlu0 %510, %v477
        %v512 = vpop.permute.xlu0 %511
        %515 = vset.pattern.permute.xlu0 0
        %516 = vperm.xlu0 %515, %v478
        %v517 = vpop.permute.xlu0 %516
        %520 = vset.pattern.permute.xlu0 0
        %521 = vperm.xlu0 %520, %v479
        %v522 = vpop.permute.xlu0 %521
        %525 = vset.pattern.permute.xlu0 0
        %526 = vperm.xlu0 %525, %v480
        %v527 = vpop.permute.xlu0 %526
        %530 = vset.pattern.permute.xlu0 0
        %531 = vperm.xlu0 %530, %v481
        %v532 = vpop.permute.xlu0 %531
        %535 = vset.pattern.permute.xlu0 0
        %536 = vperm.xlu0 %535, %v482
        %v537 = vpop.permute.xlu0 %536
        %540 = vset.pattern.permute.xlu0 0
        %541 = vperm.xlu0 %540, %v483
        %v542 = vpop.permute.xlu0 %541
        %545 = vset.pattern.permute.xlu0 0
        %546 = vperm.xlu0 %545, %v484
        %v547 = vpop.permute.xlu0 %546
        %550 = vset.pattern.permute.xlu0 0
        %551 = vperm.xlu0 %550, %v485
        %v552 = vpop.permute.xlu0 %551
        %555 = vset.pattern.permute.xlu0 0
        %556 = vperm.xlu0 %555, %v486
        %v557 = vpop.permute.xlu0 %556
        %560 = vset.pattern.permute.xlu0 0
        %561 = vperm.xlu0 %560, %v487
        %v562 = vpop.permute.xlu0 %561
        %565 = vset.pattern.permute.xlu0 0
        %566 = vperm.xlu0 %565, %v488
        %v567 = vpop.permute.xlu0 %566
        %v585 = vunpack.c.l.b16 %v457
        %v586 = vunpack.c.l.b16 %v458
        %v587 = vunpack.c.l.b16 %v459
        %v588 = vunpack.c.l.b16 %v460
        %v589 = vunpack.c.l.b16 %v461
        %v590 = vunpack.c.l.b16 %v462
        %v591 = vunpack.c.l.b16 %v463
        %v592 = vunpack.c.l.b16 %v464
        %v593 = vunpack.c.l.b16 %v465
        %v594 = vunpack.c.l.b16 %v466
        %v595 = vunpack.c.l.b16 %v467
        %v596 = vunpack.c.l.b16 %v468
        %v597 = vunpack.c.l.b16 %v469
        %v598 = vunpack.c.l.b16 %v470
        %v599 = vunpack.c.l.b16 %v471
        %v600 = vunpack.c.l.b16 %v472
        %v601 = vpack.c.b16 %v586, %v585
        %v602 = vpack.c.b16 %v588, %v587
        %v603 = vpack.c.b16 %v590, %v589
        %v604 = vpack.c.b16 %v592, %v591
        %v605 = vpack.c.b16 %v594, %v593
        %v606 = vpack.c.b16 %v596, %v595
        %v607 = vpack.c.b16 %v598, %v597
        %v608 = vpack.c.b16 %v600, %v599
        %vm609 = vcmask 261120
        %v611 = vsel %vm609, %v601, 0
        %v614 = vsel %vm609, %v602, 0
        %v617 = vsel %vm609, %v603, 0
        %v620 = vsel %vm609, %v604, 0
        %v623 = vsel %vm609, %v605, 0
        %v626 = vsel %vm609, %v606, 0
        %v629 = vsel %vm609, %v607, 0
        %v632 = vsel %vm609, %v608, 0
        %634 = vmatpush.bf16.msra.mxu0 0
        %635 = vmatpush.bf16.msra.mxu0 0
        %636 = vmatpush.bf16.msra.mxu0 0
        %637 = vmatpush.bf16.msra.mxu0 0
        %638 = vmatpush.bf16.msra.mxu0 0
        %639 = vmatpush.bf16.msra.mxu0 0
        %640 = vmatpush.bf16.msra.mxu0 %v455
        %641 = vmatpush.bf16.msra.mxu0 %v453
        %642 = vmatmul.bf16.gmra.mxu0 %v611
        %v643 = vpop.f32.mrf.mxu0
        %v644 = vadd.f32 %v492, %v643
        %v645 = vpop.f32.mrf.mxu0
        %v646 = vadd.f32 %v497, %v645
        %647 = vmatmul.bf16.gmra.mxu0 %v614
        %v648 = vpop.f32.mrf.mxu0
        %v649 = vadd.f32 %v502, %v648
        %v650 = vpop.f32.mrf.mxu0
        %v651 = vadd.f32 %v507, %v650
        %652 = vmatmul.bf16.gmra.mxu0 %v617
        %v653 = vpop.f32.mrf.mxu0
        %v654 = vadd.f32 %v512, %v653
        %v655 = vpop.f32.mrf.mxu0
        %v656 = vadd.f32 %v517, %v655
        %657 = vmatmul.bf16.gmra.mxu0 %v620
        %v658 = vpop.f32.mrf.mxu0
        %v659 = vadd.f32 %v522, %v658
        %v660 = vpop.f32.mrf.mxu0
        %v661 = vadd.f32 %v527, %v660
        %662 = vmatmul.bf16.gmra.mxu0 %v623
        %v663 = vpop.f32.mrf.mxu0
        %v664 = vadd.f32 %v532, %v663
        %v665 = vpop.f32.mrf.mxu0
        %v666 = vadd.f32 %v537, %v665
        %667 = vmatmul.bf16.gmra.mxu0 %v626
        %v668 = vpop.f32.mrf.mxu0
        %v669 = vadd.f32 %v542, %v668
        %v670 = vpop.f32.mrf.mxu0
        %v671 = vadd.f32 %v547, %v670
        %672 = vmatmul.bf16.gmra.mxu0 %v629
        %v673 = vpop.f32.mrf.mxu0
        %v674 = vadd.f32 %v552, %v673
        %v675 = vpop.f32.mrf.mxu0
        %v676 = vadd.f32 %v557, %v675
        %677 = vmatmul.bf16.gmra.mxu0 %v632
        %v678 = vpop.f32.mrf.mxu0
        %v679 = vadd.f32 %v562, %v678
        %v680 = vpop.f32.mrf.mxu0
        %v681 = vadd.f32 %v567, %v680
        %682 = vdwg.mxu0
        %683 = vmatpush.bf16.msra.mxu0 0
        %684 = vmatpush.bf16.msra.mxu0 0
        %685 = vmatpush.bf16.msra.mxu0 0
        %686 = vmatpush.bf16.msra.mxu0 0
        %687 = vmatpush.bf16.msra.mxu0 0
        %688 = vmatpush.bf16.msra.mxu0 0
        %689 = vmatpush.bf16.msra.mxu0 %v456
        %690 = vmatpush.bf16.msra.mxu0 %v454
        %691 = vmatmul.bf16.gmra.mxu0 %v611
        %v692 = vpop.f32.mrf.mxu0
        %v693 = vadd.f32 %v492, %v692
        %v694 = vpop.f32.mrf.mxu0
        %v695 = vadd.f32 %v497, %v694
        %696 = vmatmul.bf16.gmra.mxu0 %v614
        %v697 = vpop.f32.mrf.mxu0
        %v698 = vadd.f32 %v502, %v697
        %v699 = vpop.f32.mrf.mxu0
        %v700 = vadd.f32 %v507, %v699
        %701 = vmatmul.bf16.gmra.mxu0 %v617
        %v702 = vpop.f32.mrf.mxu0
        %v703 = vadd.f32 %v512, %v702
        %v704 = vpop.f32.mrf.mxu0
        %v705 = vadd.f32 %v517, %v704
        %706 = vmatmul.bf16.gmra.mxu0 %v620
        %v707 = vpop.f32.mrf.mxu0
        %v708 = vadd.f32 %v522, %v707
        %v709 = vpop.f32.mrf.mxu0
        %v710 = vadd.f32 %v527, %v709
        %711 = vmatmul.bf16.gmra.mxu0 %v623
        %v712 = vpop.f32.mrf.mxu0
        %v713 = vadd.f32 %v532, %v712
        %v714 = vpop.f32.mrf.mxu0
        %v715 = vadd.f32 %v537, %v714
        %716 = vmatmul.bf16.gmra.mxu0 %v626
        %v717 = vpop.f32.mrf.mxu0
        %v718 = vadd.f32 %v542, %v717
        %v719 = vpop.f32.mrf.mxu0
        %v720 = vadd.f32 %v547, %v719
        %721 = vmatmul.bf16.gmra.mxu0 %v629
        %v722 = vpop.f32.mrf.mxu0
        %v723 = vadd.f32 %v552, %v722
        %v724 = vpop.f32.mrf.mxu0
        %v725 = vadd.f32 %v557, %v724
        %726 = vmatmul.bf16.gmra.mxu0 %v632
        %v727 = vpop.f32.mrf.mxu0
        %v728 = vadd.f32 %v562, %v727
        %v729 = vpop.f32.mrf.mxu0
        %v730 = vadd.f32 %v567, %v729
        %731 = vdwg.mxu0
        %v732 = vpack.c.bf16 %v646, %v644
        %v733 = vpack.c.bf16 %v695, %v693
        %v734 = vpack.c.bf16 %v651, %v649
        %v735 = vpack.c.bf16 %v700, %v698
        %v736 = vpack.c.bf16 %v656, %v654
        %v737 = vpack.c.bf16 %v705, %v703
        %v738 = vpack.c.bf16 %v661, %v659
        %v739 = vpack.c.bf16 %v710, %v708
        %v740 = vpack.c.bf16 %v666, %v664
        %v741 = vpack.c.bf16 %v715, %v713
        %v742 = vpack.c.bf16 %v671, %v669
        %v743 = vpack.c.bf16 %v720, %v718
        %v744 = vpack.c.bf16 %v676, %v674
        %v745 = vpack.c.bf16 %v725, %v723
        %v746 = vpack.c.bf16 %v681, %v679
        %v747 = vpack.c.bf16 %v730, %v728
        %v748 = vunpack.c.l.bf16 %v732
        %v749 = vunpack.c.l.bf16 %v733
        %v750 = vunpack.c.h.bf16 %v732
        %v751 = vunpack.c.h.bf16 %v733
        %v752 = vunpack.c.l.bf16 %v734
        %v753 = vunpack.c.l.bf16 %v735
        %v754 = vunpack.c.h.bf16 %v734
        %v755 = vunpack.c.h.bf16 %v735
        %v756 = vunpack.c.l.bf16 %v736
        %v757 = vunpack.c.l.bf16 %v737
        %v758 = vunpack.c.h.bf16 %v736
        %v759 = vunpack.c.h.bf16 %v737
        %v760 = vunpack.c.l.bf16 %v738
        %v761 = vunpack.c.l.bf16 %v739
        %v762 = vunpack.c.h.bf16 %v738
        %v763 = vunpack.c.h.bf16 %v739
        %v764 = vunpack.c.l.bf16 %v740
        %v765 = vunpack.c.l.bf16 %v741
        %v766 = vunpack.c.h.bf16 %v740
        %v767 = vunpack.c.h.bf16 %v741
        %v768 = vunpack.c.l.bf16 %v742
        %v769 = vunpack.c.l.bf16 %v743
        %v770 = vunpack.c.h.bf16 %v742
        %v771 = vunpack.c.h.bf16 %v743
        %v772 = vunpack.c.l.bf16 %v744
        %v773 = vunpack.c.l.bf16 %v745
        %v774 = vunpack.c.h.bf16 %v744
        %v775 = vunpack.c.h.bf16 %v745
        %v776 = vunpack.c.l.bf16 %v746
        %v777 = vunpack.c.l.bf16 %v747
        %v778 = vunpack.c.h.bf16 %v746
        %v779 = vunpack.c.h.bf16 %v747
        %v780 = vtanh.pop %v748
        %v781 = vtanh.pop %v749
        %v782 = vtanh.pop %v750
        %v783 = vtanh.pop %v751
        %v784 = vtanh.pop %v752
        %v785 = vtanh.pop %v753
        %v786 = vtanh.pop %v754
        %v787 = vtanh.pop %v755
        %v788 = vtanh.pop %v756
        %v789 = vtanh.pop %v757
        %v790 = vtanh.pop %v758
        %v791 = vtanh.pop %v759
        %v792 = vtanh.pop %v760
        %v793 = vtanh.pop %v761
        %v794 = vtanh.pop %v762
        %v795 = vtanh.pop %v763
        %v796 = vtanh.pop %v764
        %v797 = vtanh.pop %v765
        %v798 = vtanh.pop %v766
        %v799 = vtanh.pop %v767
        %v800 = vtanh.pop %v768
        %v801 = vtanh.pop %v769
        %v802 = vtanh.pop %v770
        %v803 = vtanh.pop %v771
        %v804 = vtanh.pop %v772
        %v805 = vtanh.pop %v773
        %v806 = vtanh.pop %v774
        %v807 = vtanh.pop %v775
        %v808 = vtanh.pop %v776
        %v809 = vtanh.pop %v777
        %v810 = vtanh.pop %v778
        %v811 = vtanh.pop %v779
        %v812 = vpack.c.bf16 %v782, %v780
        %v813 = vpack.c.bf16 %v783, %v781
        %v814 = vpack.c.bf16 %v786, %v784
        %v815 = vpack.c.bf16 %v787, %v785
        %v816 = vpack.c.bf16 %v790, %v788
        %v817 = vpack.c.bf16 %v791, %v789
        %v818 = vpack.c.bf16 %v794, %v792
        %v819 = vpack.c.bf16 %v795, %v793
        %v820 = vpack.c.bf16 %v798, %v796
        %v821 = vpack.c.bf16 %v799, %v797
        %v822 = vpack.c.bf16 %v802, %v800
        %v823 = vpack.c.bf16 %v803, %v801
        %v824 = vpack.c.bf16 %v806, %v804
        %v825 = vpack.c.bf16 %v807, %v805
        %v826 = vpack.c.bf16 %v810, %v808
        %v827 = vpack.c.bf16 %v811, %v809
        %v828 = vld [vmem:[#allocation2] sm:$0xf]
        %v829 = vld [vmem:[#allocation2 + $0x4] sm:$0xf]
        %v830 = vld [vmem:[#allocation2 + $0x8] sm:$0xf]
        %v831 = vld [vmem:[#allocation2 + $0xc] sm:$0xf]
        %v832 = vld [vmem:[%s6] sm:$0xff]
        %v833 = vld [vmem:[%s6 + $0x8] sm:$0xff]
        %v834 = vld [vmem:[%s6 + $0x10] sm:$0xff]
        %v835 = vld [vmem:[%s6 + $0x18] sm:$0xff]
        %837 = vset.pattern.permute.xlu0 0
        %838 = vperm.xlu0 %837, %v832
        %v839 = vpop.permute.xlu0 %838
        %842 = vset.pattern.permute.xlu0 0
        %843 = vperm.xlu0 %842, %v833
        %v844 = vpop.permute.xlu0 %843
        %847 = vset.pattern.permute.xlu0 0
        %848 = vperm.xlu0 %847, %v834
        %v849 = vpop.permute.xlu0 %848
        %852 = vset.pattern.permute.xlu0 0
        %853 = vperm.xlu0 %852, %v835
        %v854 = vpop.permute.xlu0 %853
        %v860 = vunpack.c.l.b16 %v828
        %v861 = vunpack.c.l.b16 %v829
        %v862 = vunpack.c.l.b16 %v830
        %v863 = vunpack.c.l.b16 %v831
        %v864 = vpack.c.b16 %v861, %v860
        %v865 = vpack.c.b16 %v863, %v862
        %868 = vmatpush.bf16.msra.mxu0 %v826
        %869 = vmatpush.bf16.msra.mxu0 %v824
        %870 = vmatpush.bf16.msra.mxu0 %v822
        %871 = vmatpush.bf16.msra.mxu0 %v820
        %872 = vmatpush.bf16.msra.mxu0 %v818
        %873 = vmatpush.bf16.msra.mxu0 %v816
        %874 = vmatpush.bf16.msra.mxu0 %v814
        %875 = vmatpush.bf16.msra.mxu0 %v812
        %876 = vmatmul.bf16.gmra.mxu0 %v864
        %v877 = vpop.f32.mrf.mxu0
        %v878 = vadd.f32 %v839, %v877
        %v879 = vpop.f32.mrf.mxu0
        %v880 = vadd.f32 %v844, %v879
        %881 = vmatmul.bf16.gmra.mxu0 %v865
        %v882 = vpop.f32.mrf.mxu0
        %v883 = vadd.f32 %v849, %v882
        %v884 = vpop.f32.mrf.mxu0
        %v885 = vadd.f32 %v854, %v884
        %886 = vdwg.mxu0
        %887 = vmatpush.bf16.msra.mxu0 %v827
        %888 = vmatpush.bf16.msra.mxu0 %v825
        %889 = vmatpush.bf16.msra.mxu0 %v823
        %890 = vmatpush.bf16.msra.mxu0 %v821
        %891 = vmatpush.bf16.msra.mxu0 %v819
        %892 = vmatpush.bf16.msra.mxu0 %v817
        %893 = vmatpush.bf16.msra.mxu0 %v815
        %894 = vmatpush.bf16.msra.mxu0 %v813
        %895 = vmatmul.bf16.gmra.mxu0 %v864
        %v896 = vpop.f32.mrf.mxu0
        %v897 = vadd.f32 %v839, %v896
        %v898 = vpop.f32.mrf.mxu0
        %v899 = vadd.f32 %v844, %v898
        %900 = vmatmul.bf16.gmra.mxu0 %v865
        %v901 = vpop.f32.mrf.mxu0
        %v902 = vadd.f32 %v849, %v901
        %v903 = vpop.f32.mrf.mxu0
        %v904 = vadd.f32 %v854, %v903
        %905 = vdwg.mxu0
        %v906 = vpack.c.bf16 %v897, %v878
        %v907 = vpack.c.bf16 %v899, %v880
        %v908 = vpack.c.bf16 %v902, %v883
        %v909 = vpack.c.bf16 %v904, %v885
        %v910 = vunpack.c.l.bf16 %v906
        %v911 = vunpack.c.h.bf16 %v906
        %v912 = vunpack.c.l.bf16 %v907
        %v913 = vunpack.c.h.bf16 %v907
        %v914 = vunpack.c.l.bf16 %v908
        %v915 = vunpack.c.h.bf16 %v908
        %v916 = vunpack.c.l.bf16 %v909
        %v917 = vunpack.c.h.bf16 %v909
        %v918 = vtanh.pop %v910
        %v919 = vtanh.pop %v911
        %v920 = vtanh.pop %v912
        %v921 = vtanh.pop %v913
        %v922 = vtanh.pop %v914
        %v923 = vtanh.pop %v915
        %v924 = vtanh.pop %v916
        %v925 = vtanh.pop %v917
        %v926 = vpack.c.bf16 %v919, %v918
        %v927 = vpack.c.bf16 %v921, %v920
        %v928 = vpack.c.bf16 %v923, %v922
        %v929 = vpack.c.bf16 %v925, %v924
        %v930 = vunpack.c.l.bf16 %v926
        %v931 = vunpack.c.h.bf16 %v926
        %v932 = vunpack.c.l.bf16 %v927
        %v933 = vunpack.c.h.bf16 %v927
        %v934 = vunpack.c.l.bf16 %v928
        %v935 = vunpack.c.h.bf16 %v928
        %v936 = vunpack.c.l.bf16 %v929
        %v937 = vunpack.c.h.bf16 %v929
        %938 = vst [vmem:[%s313] sm:$0xff] %v930
        %939 = vst [vmem:[%s313 + $0x8] sm:$0xff] %v931
        %940 = vst [vmem:[%s313 + $0x10] sm:$0xff] %v932
        %941 = vst [vmem:[%s313 + $0x18] sm:$0xff] %v933
        %942 = vst [vmem:[%s313 + $0x20] sm:$0xff] %v934
        %943 = vst [vmem:[%s313 + $0x28] sm:$0xff] %v935
        %944 = vst [vmem:[%s313 + $0x30] sm:$0xff] %v936
        %945 = vst [vmem:[%s313 + $0x38] sm:$0xff] %v937
        %s946 = sand.u32 %s198, 1
        %s947 = scalar_lea.sflag [#allocation4], %s946
        %s948 = sand.u32 %s198, 1
        %s949 = smul.addr %s948, 64
        %s950 = scalar_lea.vmem [#allocation5], %s949
        // Predicated region
        $region53: #{tpu_custom_call.1} parent=47 // pred_check
          %p951 = pneg %p208
        $region54: #{tpu_custom_call.1} parent=47 // pred_check_branch
          %953 = sbr.rel (%p951) target = $region56
        $region55: #{tpu_custom_call.1} parent=47 // pred_region
          %s954 = smul.u32 2, %s27
          %956 = vsyncadd %s947, 0
          %s957 = smul.addr %s26, 8
          %s958 = sadd.s32 %s954, %s957
          %s959 = smul.addr %s958, 8
          %s960 = scalar_lea.hbm %s7, %s959
          %s961 = sshll.u32 %s950, 4
          %s962 = int_to_ptr.vmem [resolvable:$true] %s961
          %s963 = sshll.u32 %s960, 4
          %s964 = int_to_ptr.hbm [resolvable:$true] %s963
          %969 = dma.vmem_to_hbm [thread:$0]  %s962, 1024, %s964, %s947, 256, 256, 16
        $region56: #{tpu_custom_call.1} parent=47 // pred_fallthru
          _
      $region48: #{tpu_custom_call.1} parent=5 // pred_fallthru
        _
      %p970 = scmp.le.s32.totalorder 2, %s17
      // Predicated region
      $region57: #{tpu_custom_call.1} parent=5 // pred_check
        %p971 = pneg %p970
      $region58: #{tpu_custom_call.1} parent=5 // pred_check_branch
        %973 = sbr.rel (%p971) target = $region60
      $region59: #{tpu_custom_call.1} parent=5 // pred_region
        %s974 = ssub.s32 %s17, 2
        // Predicated region
        $region61: #{tpu_custom_call.1} parent=59 // pred_check
          %p975 = pneg %p214
        $region62: #{tpu_custom_call.1} parent=59 // pred_check_branch
          %977 = sbr.rel (%p975) target = $region64
        $region63: #{tpu_custom_call.1} parent=59 // pred_region
          %s978 = sand.u32 %s199, 1
          %s979 = scalar_lea.sflag [#allocation4], %s978
          %s980 = sand.u32 %s199, 1
          %s981 = smul.addr %s980, 64
          %s982 = scalar_lea.vmem [#allocation5], %s981
          %984 = dma.done %s979, 1024
        $region64: #{tpu_custom_call.1} parent=59 // pred_fallthru
          _
      $region60: #{tpu_custom_call.1} parent=5 // pred_fallthru
        _
    $region6: #{tpu_custom_call.1} parent=1 // loop_footer
      %s21 = sadd.s32 1, %s17
    $region7: #{tpu_custom_call.1} parent=1 // loop_footer_branch
      %16 = sbr.rel target = $region3
    $region8: #{tpu_custom_call.1} parent=1 // loop_exit
      _
    %985 = vsyncpa [#allocation3], 1
    %s986 = scalar_lea.sflag [#allocation3], 1
    %987 = vsyncpa %s986, 1
    %988 = vsyncpa [#allocation4], 1
    %s989 = scalar_lea.sflag [#allocation4], 1
    %990 = vsyncpa %s989, 1

</llo_original>
